<compile_context>
chip_gen: v6e
topology: v6e:2x2x1
jax: 0.10.0
libtpu: 0.0.40
codegen_flags: <defaults>
</compile_context>

<pallas_src>
import jax
import jax.numpy as jnp
from jax.experimental import pallas as pl
from jax.experimental.pallas import tpu as pltpu


def _round_up(x, m):
    return ((x + m - 1) // m) * m


def _map_reduce_kernel(x_ref, w_ref, b_ref, o_ref):
    # x_ref: (1, C, THW), w_ref: (64, C), b_ref: (64, 1), o_ref: (1, 64, THW)
    x = x_ref[0]                                                       # (C, THW)
    acc = jnp.dot(w_ref[...], x, preferred_element_type=jnp.float32)  # (64, THW)
    o_ref[0] = (acc + b_ref[...]).astype(o_ref.dtype)


def map_reduce_forward(x_nchw, weight, bias, *, thw=8192):
    """1x1 conv forward (MapReduce).

    x_nchw : (N, C, H, W) float32
    weight : (64, C, 1, 1) float32   (PyTorch Conv2d weight layout)
    bias   : (64,) float32
    returns: (N, 64, H, W) float32
    """
    N, C, H, W = x_nchw.shape
    out_ch = weight.shape[0]
    HW = H * W

    # Free reshapes only (no transposes): NCHW -> (N, C, HW).
    x3 = x_nchw.reshape(N, C, HW)
    w_mat = weight.reshape(out_ch, C)          # (64, C)  resident weight
    b_col = bias.reshape(out_ch, 1)            # (64, 1)  resident bias column

    # Spatial tile: lane-dense (multiple of 128), as large as is useful but
    # tiny in VMEM (even at 8192: ~0.13 MiB in + ~2 MiB out, double-buffered).
    thw = max(128, min(thw, _round_up(HW, 128)))
    thw = _round_up(thw, 128)
    HW_pad = _round_up(HW, thw)
    if HW_pad != HW:
        # Padded columns compute garbage-free values (0*w + b) and are sliced off.
        x3 = jnp.pad(x3, ((0, 0), (0, 0), (0, HW_pad - HW)))

    out = pl.pallas_call(
        _map_reduce_kernel,
        out_shape=jax.ShapeDtypeStruct((N, out_ch, HW_pad), x_nchw.dtype),
        grid_spec=pltpu.PrefetchScalarGridSpec(
            num_scalar_prefetch=0,
            grid=(N, HW_pad // thw),
            in_specs=[
                pl.BlockSpec((1, C, thw), lambda n, j: (n, 0, j)),   # activations tile
                pl.BlockSpec((out_ch, C), lambda n, j: (0, 0)),      # full weight (resident)
                pl.BlockSpec((out_ch, 1), lambda n, j: (0, 0)),      # bias column (resident)
            ],
            out_specs=pl.BlockSpec((1, out_ch, thw), lambda n, j: (n, 0, j)),
        ),
        compiler_params=pltpu.CompilerParams(
            # Both grid axes are independent -> megacore sharding on v7x.
            dimension_semantics=("parallel", "parallel"),
            # Covers larger tiles on v5e's 16 MiB scoped default; well under
            # v7x's 64 MiB physical VMEM.
            vmem_limit_bytes=32 * 1024 * 1024,
        ),
    )(x3, w_mat, b_col)

    if HW_pad != HW:
        out = out[:, :, :HW]
    return out.reshape(N, out_ch, H, W)


if __name__ == "__main__":
    key = jax.random.PRNGKey(0)
    kx, kw = jax.random.split(key)

    N, C, H, W = 2, 4, 16, 16
    OUT = 64

    x = jax.random.normal(kx, (N, C, H, W), dtype=jnp.float32)
    # Deterministic synthetic conv weight; bias = 0 per nn.init.constant_.
    weight = jax.random.normal(kw, (OUT, C, 1, 1), dtype=jnp.float32) * 0.1
    bias = jnp.zeros((OUT,), dtype=jnp.float32)

    y = map_reduce_forward(x, weight, bias)
    y = jax.block_until_ready(y)

    # Reference: plain-JAX 1x1 conv (einsum over channels).
    y_ref = jnp.einsum("nchw,oc->nohw", x, weight.reshape(OUT, C)) + bias[None, :, None, None]

    assert y.shape == (N, OUT, H, W)
    assert jnp.allclose(y, y_ref, atol=1e-5, rtol=1e-5)

    print("KERNEL_OK")
</pallas_src>

<mosaic_0001>
module attributes {stable_mosaic.version = 11 : i64} {
  func.func @_map_reduce_kernel(%arg0: i32, %arg1: i32, %arg2: memref<1x4x256xf32, #tpu.memory_space<vmem>>, %arg3: memref<64x4xf32, #tpu.memory_space<vmem>>, %arg4: memref<64x1xf32, #tpu.memory_space<vmem>>, %arg5: memref<1x64x256xf32, #tpu.memory_space<vmem>>) attributes {dimension_semantics = [#tpu.dimension_semantics<parallel>, #tpu.dimension_semantics<parallel>], iteration_bounds = array<i64: 2, 1>, scalar_prefetch = 0 : i64, scratch_operands = 0 : i64, tpu.core_type = #tpu.core_type<tc>, window_params = [{transform_indices = @transform_0, window_bounds = array<i64: 1, 4, 256>}, {pipeline_mode = #tpu.pipeline_mode<synchronous>, transform_indices = @transform_1, window_bounds = array<i64: 64, 4>}, {pipeline_mode = #tpu.pipeline_mode<synchronous>, transform_indices = @transform_2, window_bounds = array<i64: 64, 1>}, {transform_indices = @transform_3, window_bounds = array<i64: 1, 64, 256>}]} {
    %c0 = arith.constant 0 : index
    %c0_0 = arith.constant 0 : index
    %c0_1 = arith.constant 0 : index
    %0 = vector.load %arg2[%c0, %c0_0, %c0_1] : memref<1x4x256xf32, #tpu.memory_space<vmem>>, vector<1x4x256xf32>
    %1 = vector.shape_cast %0 : vector<1x4x256xf32> to vector<4x256xf32>
    %c0_2 = arith.constant 0 : index
    %c0_3 = arith.constant 0 : index
    %2 = vector.load %arg3[%c0_2, %c0_3] : memref<64x4xf32, #tpu.memory_space<vmem>>, vector<64x4xf32>
    %cst = arith.constant dense<0.000000e+00> : vector<64x256xf32>
    %3 = tpu.matmul %2, %1, %cst {dimension_numbers = #tpu.dot_dimension_numbers<[1], [0], [0], [1], [0, 0, 1, 1], [], []>} : vector<64x4xf32>, vector<4x256xf32>, vector<64x256xf32> -> vector<64x256xf32>
    %c0_4 = arith.constant 0 : index
    %c0_5 = arith.constant 0 : index
    %4 = vector.load %arg4[%c0_4, %c0_5] : memref<64x1xf32, #tpu.memory_space<vmem>>, vector<64x1xf32>
    %5 = vector.broadcast %4 : vector<64x1xf32> to vector<64x256xf32>
    %6 = arith.addf %3, %5 : vector<64x256xf32>
    %c0_6 = arith.constant 0 : index
    %c0_7 = arith.constant 0 : index
    %c0_8 = arith.constant 0 : index
    %7 = vector.load %arg5[%c0_6, %c0_7, %c0_8] : memref<1x64x256xf32, #tpu.memory_space<vmem>>, vector<1x64x256xf32>
    %8 = vector.shape_cast %7 : vector<1x64x256xf32> to vector<64x256xf32>
    %9 = vector.shape_cast %6 : vector<64x256xf32> to vector<1x64x256xf32>
    tpu.vector_store %arg5[%c0_6, %c0_7, %c0_8], %9 {strides = array<i32>} : memref<1x64x256xf32, #tpu.memory_space<vmem>>, vector<1x64x256xf32>,
    return
  }
  func.func @transform_0(%arg0: i32, %arg1: i32) -> (i32, i32, i32) {
    %c0_i32 = arith.constant 0 : i32
    %c0_i32_0 = arith.constant 0 : i32
    return %arg0, %c0_i32, %arg1 : i32, i32, i32
  }
  func.func @transform_1(%arg0: i32, %arg1: i32) -> (i32, i32) {
    %c0_i32 = arith.constant 0 : i32
    %c0_i32_0 = arith.constant 0 : i32
    %c0_i32_1 = arith.constant 0 : i32
    return %c0_i32, %c0_i32_0 : i32, i32
  }
  func.func @transform_2(%arg0: i32, %arg1: i32) -> (i32, i32) {
    %c0_i32 = arith.constant 0 : i32
    %c0_i32_0 = arith.constant 0 : i32
    %c0_i32_1 = arith.constant 0 : i32
    return %c0_i32, %c0_i32_0 : i32, i32
  }
  func.func @transform_3(%arg0: i32, %arg1: i32) -> (i32, i32, i32) {
    %c0_i32 = arith.constant 0 : i32
    %c0_i32_0 = arith.constant 0 : i32
    return %arg0, %c0_i32, %arg1 : i32, i32, i32
  }
}

</mosaic_0001>

<llo_original>
// kernel: tpu_custom_call.1
$region0: #{tpu_custom_call.1}
  #allocation0 [shape = 'u32[]', space=smem, size = 0x4, offset = 0x4, fixed_abs, tag = 'smem constant byte address 0x4 - core index']
  #allocation1 [shape = 'u32[144,128]{1,0:T(1,128)}', space=vmem, size = 0x12000, scoped, tag = 'internal scratch']
  %s0 = inlined_call_operand.vmem [shape: f32[2,4,256], index: 0, kind: input, shape index: {}]
  %s1 = inlined_call_operand.vmem [shape: f32[64,4], index: 1, kind: input, shape index: {}]
  %s2 = inlined_call_operand.vmem [shape: f32[64,1], index: 2, kind: input, shape index: {}]
  %s3 = inlined_call_operand.hbm [shape: f32[2,64,256], index: 3, kind: output, shape index: {}]
  %s4 = sld [smem:[#allocation0]]
  $region45: #{tpu_custom_call.1} parent=0
    _
  %s6 = ssub.s32 1, %s4
  %s7 = scalar_select 0, %s6, %s4
  $region1: #{tpu_custom_call.1} parent=0
    #allocation2 [shape = 'u8[131072]{0}', space=vmem, size = 0x20000, scoped, tag = 'output window, operand 0']
    #allocation3 [shape = 's32[2]{0}', space=sflag, size = 0x8, scoped, tag = 'scoped memory for tpu_custom_call.1']
    %8 = vsyncpa [#allocation3], 0
    %s9 = scalar_lea.sflag [#allocation3], 1
    %10 = vsyncpa %s9, 0
    loop: start=0, step=1, limit=4
    $region2: #{tpu_custom_call.1} parent=1 // loop_pre_header
      _
    $region3: #{tpu_custom_call.1} parent=1 // loop_header
      %s12 = sphi 0, %s16
      %p13 = scmp.ge.s32.totalorder %s12, 4
      %s19 = sphi 0, %s31
      %s20 = sphi 0, %s27
      %s21 = sphi 0, %s19
      %s22 = sphi 0, %s20
      %s23 = sphi 0, %s21
      %s24 = sphi 0, %s22
      %s36 = sphi 0, %s38
      %s39 = sphi 0, %s36
      %s40 = sphi 0, %s39
      %s56 = sphi 0, %s40
      %s60 = sphi 0, %s60
      %s62 = sphi 0, %s60
      %s63 = sphi 0, %s62
      %s77 = sphi 0, %s63
      %s81 = sphi 0, %s81
      %s83 = sphi 0, %s81
      %s84 = sphi 0, %s83
      %s98 = sphi 0, %s84
      %s106 = sphi 0, %s108
      %s109 = sphi 0, %s106
      %s110 = sphi 0, %s109
      %s126 = sphi 0, %s110
    $region4: #{tpu_custom_call.1} parent=1 // loop_header_branch
      %15 = sbr.rel (%p13) target = $region8
    $region5: #{tpu_custom_call.1} parent=1 // loop_body
      %s17 = ssub.s32 %s12, 1
      %s18 = ssub.s32 %s12, 2
      %s25 = sadd.s32 1, %s20
      %p26 = scmp.ge.s32.totalorder %s25, 1
      %s27 = scalar_select %p26, 0, %s25
      %s28 = sadd.s32 1, %s19
      %s29 = scalar_select %p26, %s28, %s19
      %p30 = scmp.ge.s32.totalorder %s29, 2
      %s31 = scalar_select %p30, 0, %s29
      %s32 = ssub.s32 %s19, %s31
      %s33 = ssub.s32 %s20, %s27
      %s34 = sor.u32 %s32, %s33
      %p35 = scmp.eq.s32.totalorder %s34, 0
      %s37 = sadd.s32 %s36, 1
      %s38 = scalar_select %p35, %s36, %s37
      %p41 = pneg %p35
      %p42 = scmp.eq.s32.totalorder %s12, 1
      %p43 = por %p41, %p42
      %p44 = scmp.ne.s32.totalorder %s36, %s39
      %p45 = scmp.eq.s32.totalorder %s12, 0
      %p46 = por %p44, %p45
      %p47 = scmp.ne.s32.totalorder %s36, %s39
      %p48 = scmp.eq.s32.totalorder %s17, 1
      %p49 = por %p47, %p48
      %p50 = scmp.ne.s32.totalorder %s39, %s40
      %p51 = scmp.eq.s32.totalorder %s17, 0
      %p52 = por %p50, %p51
      %p53 = scmp.ne.s32.totalorder %s39, %s40
      %p54 = scmp.eq.s32.totalorder %s18, 1
      %p55 = por %p53, %p54
      %p57 = scmp.ne.s32.totalorder %s40, %s56
      %p58 = scmp.eq.s32.totalorder %s18, 0
      %p59 = por %p57, %p58
      %s61 = sadd.s32 %s60, 1
      %p64 = scmp.eq.s32.totalorder %s12, 1
      %p65 = scmp.ne.s32.totalorder %s60, %s62
      %p66 = scmp.eq.s32.totalorder %s12, 0
      %p67 = por %p65, %p66
      %p68 = scmp.ne.s32.totalorder %s60, %s62
      %p69 = scmp.eq.s32.totalorder %s17, 1
      %p70 = por %p68, %p69
      %p71 = scmp.ne.s32.totalorder %s62, %s63
      %p72 = scmp.eq.s32.totalorder %s17, 0
      %p73 = por %p71, %p72
      %p74 = scmp.ne.s32.totalorder %s62, %s63
      %p75 = scmp.eq.s32.totalorder %s18, 1
      %p76 = por %p74, %p75
      %p78 = scmp.ne.s32.totalorder %s63, %s77
      %p79 = scmp.eq.s32.totalorder %s18, 0
      %p80 = por %p78, %p79
      %s82 = sadd.s32 %s81, 1
      %p85 = scmp.eq.s32.totalorder %s12, 1
      %p86 = scmp.ne.s32.totalorder %s81, %s83
      %p87 = scmp.eq.s32.totalorder %s12, 0
      %p88 = por %p86, %p87
      %p89 = scmp.ne.s32.totalorder %s81, %s83
      %p90 = scmp.eq.s32.totalorder %s17, 1
      %p91 = por %p89, %p90
      %p92 = scmp.ne.s32.totalorder %s83, %s84
      %p93 = scmp.eq.s32.totalorder %s17, 0
      %p94 = por %p92, %p93
      %p95 = scmp.ne.s32.totalorder %s83, %s84
      %p96 = scmp.eq.s32.totalorder %s18, 1
      %p97 = por %p95, %p96
      %p99 = scmp.ne.s32.totalorder %s84, %s98
      %p100 = scmp.eq.s32.totalorder %s18, 0
      %p101 = por %p99, %p100
      %s102 = ssub.s32 %s19, %s31
      %s103 = ssub.s32 %s20, %s27
      %s104 = sor.u32 %s102, %s103
      %p105 = scmp.eq.s32.totalorder %s104, 0
      %s107 = sadd.s32 %s106, 1
      %s108 = scalar_select %p105, %s106, %s107
      %p111 = pneg %p105
      %p112 = scmp.eq.s32.totalorder %s12, 1
      %p113 = por %p111, %p112
      %p114 = scmp.ne.s32.totalorder %s106, %s109
      %p115 = scmp.eq.s32.totalorder %s12, 0
      %p116 = por %p114, %p115
      %p117 = scmp.ne.s32.totalorder %s106, %s109
      %p118 = scmp.eq.s32.totalorder %s17, 1
      %p119 = por %p117, %p118
      %p120 = scmp.ne.s32.totalorder %s109, %s110
      %p121 = scmp.eq.s32.totalorder %s17, 0
      %p122 = por %p120, %p121
      %p123 = scmp.ne.s32.totalorder %s109, %s110
      %p124 = scmp.eq.s32.totalorder %s18, 1
      %p125 = por %p123, %p124
      %p127 = scmp.ne.s32.totalorder %s110, %s126
      %p128 = scmp.eq.s32.totalorder %s18, 0
      %p129 = por %p127, %p128
      %p130 = scmp.le.s32.totalorder 1, %s12
      %p131 = scmp.lt.s32.totalorder %s12, 3
      %p132 = pnand %p130, %p131
      %p133 = pneg %p132
      // Predicated region
      $region9: #{tpu_custom_call.1} parent=5 // pred_check
        _
      $region10: #{tpu_custom_call.1} parent=5 // pred_check_branch
        %135 = sbr.rel (%p132) target = $region12
      $region11: #{tpu_custom_call.1} parent=5 // pred_region
        %s136 = ssub.s32 %s12, 1
        // Predicated region
        $region13: #{tpu_custom_call.1} parent=11 // pred_check
          %p137 = pneg %p73
        $region14: #{tpu_custom_call.1} parent=11 // pred_check_branch
          %139 = sbr.rel (%p137) target = $region16
        $region15: #{tpu_custom_call.1} parent=11 // pred_region
          _
        $region16: #{tpu_custom_call.1} parent=11 // pred_fallthru
          _
        // Predicated region
        $region17: #{tpu_custom_call.1} parent=11 // pred_check
          %p140 = pneg %p94
        $region18: #{tpu_custom_call.1} parent=11 // pred_check_branch
          %142 = sbr.rel (%p140) target = $region20
        $region19: #{tpu_custom_call.1} parent=11 // pred_region
          _
        $region20: #{tpu_custom_call.1} parent=11 // pred_fallthru
          _
      $region12: #{tpu_custom_call.1} parent=5 // pred_fallthru
        _
      %p143 = scmp.lt.s32.totalorder %s12, 2
      // Predicated region
      $region21: #{tpu_custom_call.1} parent=5 // pred_check
        %p144 = pneg %p143
      $region22: #{tpu_custom_call.1} parent=5 // pred_check_branch
        %146 = sbr.rel (%p144) target = $region24
      $region23: #{tpu_custom_call.1} parent=5 // pred_region
        // Predicated region
        $region25: #{tpu_custom_call.1} parent=23 // pred_check
          %p147 = pneg %p46
        $region26: #{tpu_custom_call.1} parent=23 // pred_check_branch
          %149 = sbr.rel (%p147) target = $region28
        $region27: #{tpu_custom_call.1} parent=23 // pred_region
          %s150 = smul.u32 2, %s20
          %p151 = scmp.lt.s32.totalorder %s19, 1
          %s152 = scalar_select %p151, %s19, 1
          %p153 = scmp.lt.s32.totalorder %s150, 1
          %s154 = scalar_select %p153, %s150, 1
          %s155 = smul.addr %s152, 2
          %s156 = sadd.s32 %s154, %s155
          %s157 = smul.addr %s156, 4
          %s158 = scalar_lea.vmem %s0, %s157
          %s159 = smul.u32 2, %s20
        $region28: #{tpu_custom_call.1} parent=23 // pred_fallthru
          _
      $region24: #{tpu_custom_call.1} parent=5 // pred_fallthru
        _
      %p160 = scmp.le.s32.totalorder 1, %s12
      %p161 = scmp.lt.s32.totalorder %s12, 3
      %p162 = pnand %p160, %p161
      %p163 = pneg %p162
      // Predicated region
      $region29: #{tpu_custom_call.1} parent=5 // pred_check
        _
      $region30: #{tpu_custom_call.1} parent=5 // pred_check_branch
        %165 = sbr.rel (%p162) target = $region32
      $region31: #{tpu_custom_call.1} parent=5 // pred_region
        %s166 = ssub.s32 %s12, 1
        %s167 = smul.u32 2, %s22
        %p168 = scmp.lt.s32.totalorder %s21, 1
        %s169 = scalar_select %p168, %s21, 1
        %p170 = scmp.lt.s32.totalorder %s167, 1
        %s171 = scalar_select %p170, %s167, 1
        %s172 = smul.addr %s169, 2
        %s173 = sadd.s32 %s171, %s172
        %s174 = smul.addr %s173, 4
        %s175 = scalar_lea.vmem %s0, %s174
        %p176 = pneg %p52
        %p177 = pneg %p49
        %p178 = pneg %p73
        %p179 = pneg %p70
        %p180 = pneg %p94
        %p181 = pneg %p91
        %p182 = pneg %p122
        %p183 = pneg %p119
        %s184 = sand.u32 %s109, 1
        %s185 = scalar_lea.sflag [#allocation3], %s184
        %s186 = sand.u32 %s109, 1
        %s187 = smul.addr %s186, 128
        %s188 = scalar_lea.vmem [#allocation2], %s187
        %s189 = smul.u32 2, %s22
        %p190 = scmp.lt.s32.totalorder %s21, 1
        %s191 = scalar_select %p190, %s21, 1
        %p192 = scmp.lt.s32.totalorder %s189, 1
        %s193 = scalar_select %p192, %s189, 1
        %s194 = smul.addr %s191, 2
        %s195 = sadd.s32 %s193, %s194
        %s196 = smul.addr %s195, 4
        %s197 = scalar_lea.vmem %s0, %s196
        %s198 = smul.u32 2, %s22
        %s199 = smul.u32 2, %s22
        %v200 = vld [vmem:[%s197] sm:$0xff]
        %v201 = vld [vmem:[%s1] sm:$0xff]
        %v202 = vld [vmem:[%s1 + $0x8] sm:$0xff]
        %v203 = vld [vmem:[%s1 + $0x10] sm:$0xff]
        %v204 = vld [vmem:[%s1 + $0x18] sm:$0xff]
        %v205 = vld [vmem:[%s1 + $0x20] sm:$0xff]
        %v206 = vld [vmem:[%s1 + $0x28] sm:$0xff]
        %v207 = vld [vmem:[%s1 + $0x30] sm:$0xff]
        %v208 = vld [vmem:[%s1 + $0x38] sm:$0xff]
        %v209 = vld [vmem:[%s2] sm:$0xff]
        %v210 = vld [vmem:[%s2 + $0x8] sm:$0xff]
        %v211 = vld [vmem:[%s2 + $0x10] sm:$0xff]
        %v212 = vld [vmem:[%s2 + $0x18] sm:$0xff]
        %v213 = vld [vmem:[%s2 + $0x20] sm:$0xff]
        %v214 = vld [vmem:[%s2 + $0x28] sm:$0xff]
        %v215 = vld [vmem:[%s2 + $0x30] sm:$0xff]
        %v216 = vld [vmem:[%s2 + $0x38] sm:$0xff]
        %218 = vset.pattern.permute.xlu0 0
        %219 = vperm.xlu0 %218, %v209
        %v220 = vpop.permute.xlu0 %219
        %223 = vset.pattern.permute.xlu0 0
        %224 = vperm.xlu0 %223, %v210
        %v225 = vpop.permute.xlu0 %224
        %228 = vset.pattern.permute.xlu0 0
        %229 = vperm.xlu0 %228, %v211
        %v230 = vpop.permute.xlu0 %229
        %233 = vset.pattern.permute.xlu0 0
        %234 = vperm.xlu0 %233, %v212
        %v235 = vpop.permute.xlu0 %234
        %238 = vset.pattern.permute.xlu0 0
        %239 = vperm.xlu0 %238, %v213
        %v240 = vpop.permute.xlu0 %239
        %243 = vset.pattern.permute.xlu0 0
        %244 = vperm.xlu0 %243, %v214
        %v245 = vpop.permute.xlu0 %244
        %248 = vset.pattern.permute.xlu0 0
        %249 = vperm.xlu0 %248, %v215
        %v250 = vpop.permute.xlu0 %249
        %253 = vset.pattern.permute.xlu0 0
        %254 = vperm.xlu0 %253, %v216
        %v255 = vpop.permute.xlu0 %254
        %v258 = vcombine.high %v200, %v200
        %vm259 = vcmask 31744
        %v261 = vsel %vm259, %v201, 0
        %v264 = vsel %vm259, %v202, 0
        %v267 = vsel %vm259, %v203, 0
        %v270 = vsel %vm259, %v204, 0
        %v273 = vsel %vm259, %v205, 0
        %v276 = vsel %vm259, %v206, 0
        %v279 = vsel %vm259, %v207, 0
        %v282 = vsel %vm259, %v208, 0
        %vm284 = vcmask 1043456
        %v285 = vsel %vm284, %v200, 0
        %v287 = vsel %vm284, %v258, 0
        %289 = vmatprep.subr.mxu0 0.0
        %290 = vmatpush1.msra.mxu0 0.0
        %291 = vmatprep.subr.mxu0 0.0
        %292 = vmatpush1.msra.mxu0 0.0
        %293 = vmatprep.subr.mxu0 0.0
        %294 = vmatpush1.msra.mxu0 0.0
        %295 = vmatprep.subr.mxu0 0.0
        %296 = vmatpush1.msra.mxu0 0.0
        %297 = vmatprep.subr.mxu0 0.0
        %298 = vmatpush1.msra.mxu0 0.0
        %299 = vmatprep.subr.mxu0 0.0
        %300 = vmatpush1.msra.mxu0 0.0
        %301 = vmatprep.subr.mxu0 0.0
        %302 = vmatpush1.msra.mxu0 0.0
        %303 = vmatprep.subr.mxu0 0.0
        %304 = vmatpush1.msra.mxu0 0.0
        %305 = vmatprep.subr.mxu0 0.0
        %306 = vmatpush1.msra.mxu0 0.0
        %307 = vmatprep.subr.mxu0 0.0
        %308 = vmatpush1.msra.mxu0 0.0
        %309 = vmatprep.subr.mxu0 0.0
        %310 = vmatpush1.msra.mxu0 0.0
        %311 = vmatprep.subr.mxu0 0.0
        %312 = vmatpush1.msra.mxu0 0.0
        %313 = vmatprep.subr.mxu0 0.0
        %314 = vmatpush1.msra.mxu0 0.0
        %315 = vmatprep.subr.mxu0 0.0
        %316 = vmatpush1.msra.mxu0 0.0
        %317 = vmatprep.subr.mxu0 0.0
        %318 = vmatpush1.msra.mxu0 0.0
        %319 = vmatprep.subr.mxu0 %v287
        %320 = vmatpush1.msra.mxu0 %v285
        %321 = vmatprep.subr.mxu0 0.0
        %322 = vmatpush2.msra.mxu0 0.0
        %323 = vmatprep.subr.mxu0 0.0
        %324 = vmatpush2.msra.mxu0 0.0
        %325 = vmatprep.subr.mxu0 0.0
        %326 = vmatpush2.msra.mxu0 0.0
        %327 = vmatprep.subr.mxu0 0.0
        %328 = vmatpush2.msra.mxu0 0.0
        %329 = vmatprep.subr.mxu0 0.0
        %330 = vmatpush2.msra.mxu0 0.0
        %331 = vmatprep.subr.mxu0 0.0
        %332 = vmatpush2.msra.mxu0 0.0
        %333 = vmatprep.subr.mxu0 0.0
        %334 = vmatpush2.msra.mxu0 0.0
        %335 = vmatprep.subr.mxu0 0.0
        %336 = vmatpush2.msra.mxu0 0.0
        %337 = vmatprep.subr.mxu0 0.0
        %338 = vmatpush2.msra.mxu0 0.0
        %339 = vmatprep.subr.mxu0 0.0
        %340 = vmatpush2.msra.mxu0 0.0
        %341 = vmatprep.subr.mxu0 0.0
        %342 = vmatpush2.msra.mxu0 0.0
        %343 = vmatprep.subr.mxu0 0.0
        %344 = vmatpush2.msra.mxu0 0.0
        %345 = vmatprep.subr.mxu0 0.0
        %346 = vmatpush2.msra.mxu0 0.0
        %347 = vmatprep.subr.mxu0 0.0
        %348 = vmatpush2.msra.mxu0 0.0
        %349 = vmatprep.subr.mxu0 0.0
        %350 = vmatpush2.msra.mxu0 0.0
        %351 = vmatprep.subr.mxu0 0.0
        %352 = vmatpush2.msra.mxu0 0.0
        %353 = vmatprep.mubr.f32.mxu0 0.0
        %354 = vmatmul.mubr.f32.gmra.mxu0 %v261
        %v355 = vpop.f32.mrf.mxu0
        %v356 = vadd.f32 %v220, %v355
        %v357 = vpop.f32.mrf.mxu0
        %v358 = vadd.f32 %v220, %v357
        %359 = vmatprep.mubr.f32.mxu0 0.0
        %360 = vmatmul.mubr.f32.gmra.mxu0 %v264
        %v361 = vpop.f32.mrf.mxu0
        %v362 = vadd.f32 %v225, %v361
        %v363 = vpop.f32.mrf.mxu0
        %v364 = vadd.f32 %v225, %v363
        %365 = vmatprep.mubr.f32.mxu0 0.0
        %366 = vmatmul.mubr.f32.gmra.mxu0 %v267
        %v367 = vpop.f32.mrf.mxu0
        %v368 = vadd.f32 %v230, %v367
        %v369 = vpop.f32.mrf.mxu0
        %v370 = vadd.f32 %v230, %v369
        %371 = vmatprep.mubr.f32.mxu0 0.0
        %372 = vmatmul.mubr.f32.gmra.mxu0 %v270
        %v373 = vpop.f32.mrf.mxu0
        %v374 = vadd.f32 %v235, %v373
        %v375 = vpop.f32.mrf.mxu0
        %v376 = vadd.f32 %v235, %v375
        %377 = vmatprep.mubr.f32.mxu0 0.0
        %378 = vmatmul.mubr.f32.gmra.mxu0 %v273
        %v379 = vpop.f32.mrf.mxu0
        %v380 = vadd.f32 %v240, %v379
        %v381 = vpop.f32.mrf.mxu0
        %v382 = vadd.f32 %v240, %v381
        %383 = vmatprep.mubr.f32.mxu0 0.0
        %384 = vmatmul.mubr.f32.gmra.mxu0 %v276
        %v385 = vpop.f32.mrf.mxu0
        %v386 = vadd.f32 %v245, %v385
        %v387 = vpop.f32.mrf.mxu0
        %v388 = vadd.f32 %v245, %v387
        %389 = vmatprep.mubr.f32.mxu0 0.0
        %390 = vmatmul.mubr.f32.gmra.mxu0 %v279
        %v391 = vpop.f32.mrf.mxu0
        %v392 = vadd.f32 %v250, %v391
        %v393 = vpop.f32.mrf.mxu0
        %v394 = vadd.f32 %v250, %v393
        %395 = vmatprep.mubr.f32.mxu0 0.0
        %396 = vmatmul.mubr.f32.gmra.mxu0 %v282
        %v397 = vpop.f32.mrf.mxu0
        %v398 = vadd.f32 %v255, %v397
        %v399 = vpop.f32.mrf.mxu0
        %v400 = vadd.f32 %v255, %v399
        %401 = vdwg.mxu0
        %402 = vst [vmem:[%s188] sm:$0xff] %v356
        %403 = vst [vmem:[%s188 + $0x8] sm:$0xff] %v358
        %404 = vst [vmem:[%s188 + $0x10] sm:$0xff] %v362
        %405 = vst [vmem:[%s188 + $0x18] sm:$0xff] %v364
        %406 = vst [vmem:[%s188 + $0x20] sm:$0xff] %v368
        %407 = vst [vmem:[%s188 + $0x28] sm:$0xff] %v370
        %408 = vst [vmem:[%s188 + $0x30] sm:$0xff] %v374
        %409 = vst [vmem:[%s188 + $0x38] sm:$0xff] %v376
        %410 = vst [vmem:[%s188 + $0x40] sm:$0xff] %v380
        %411 = vst [vmem:[%s188 + $0x48] sm:$0xff] %v382
        %412 = vst [vmem:[%s188 + $0x50] sm:$0xff] %v386
        %413 = vst [vmem:[%s188 + $0x58] sm:$0xff] %v388
        %414 = vst [vmem:[%s188 + $0x60] sm:$0xff] %v392
        %415 = vst [vmem:[%s188 + $0x68] sm:$0xff] %v394
        %416 = vst [vmem:[%s188 + $0x70] sm:$0xff] %v398
        %417 = vst [vmem:[%s188 + $0x78] sm:$0xff] %v400
        %s418 = sand.u32 %s109, 1
        %s419 = scalar_lea.sflag [#allocation3], %s418
        %s420 = sand.u32 %s109, 1
        %s421 = smul.addr %s420, 128
        %s422 = scalar_lea.vmem [#allocation2], %s421
        // Predicated region
        $region33: #{tpu_custom_call.1} parent=31 // pred_check
          %p423 = pneg %p119
        $region34: #{tpu_custom_call.1} parent=31 // pred_check_branch
          %425 = sbr.rel (%p423) target = $region36
        $region35: #{tpu_custom_call.1} parent=31 // pred_region
          %s426 = smul.u32 2, %s22
          %s428 = ssub.s32 2048, 2048
          %429 = vsyncadd %s419, %s428
          %s430 = smul.addr %s21, 16
          %s431 = sadd.s32 %s426, %s430
          %s432 = smul.addr %s431, 128
          %s433 = scalar_lea.hbm %s3, %s432
          %s434 = sshll.u32 %s422, 4
          %s435 = int_to_ptr.vmem [resolvable:$true] %s434
          %440 = dma.vmem_to_hbm [thread:$0]  %s435, 2048, %s433, %s419, 256, 256, 16
        $region36: #{tpu_custom_call.1} parent=31 // pred_fallthru
          _
      $region32: #{tpu_custom_call.1} parent=5 // pred_fallthru
        _
      %p441 = scmp.le.s32.totalorder 2, %s12
      // Predicated region
      $region37: #{tpu_custom_call.1} parent=5 // pred_check
        %p442 = pneg %p441
      $region38: #{tpu_custom_call.1} parent=5 // pred_check_branch
        %444 = sbr.rel (%p442) target = $region40
      $region39: #{tpu_custom_call.1} parent=5 // pred_region
        %s445 = ssub.s32 %s12, 2
        // Predicated region
        $region41: #{tpu_custom_call.1} parent=39 // pred_check
          %p446 = pneg %p125
        $region42: #{tpu_custom_call.1} parent=39 // pred_check_branch
          %448 = sbr.rel (%p446) target = $region44
        $region43: #{tpu_custom_call.1} parent=39 // pred_region
          %s449 = sand.u32 %s110, 1
          %s450 = scalar_lea.sflag [#allocation3], %s449
          %s451 = sand.u32 %s110, 1
          %s452 = smul.addr %s451, 128
          %s453 = scalar_lea.vmem [#allocation2], %s452
          %454 = dma.done %s450, 2048
        $region44: #{tpu_custom_call.1} parent=39 // pred_fallthru
          _
      $region40: #{tpu_custom_call.1} parent=5 // pred_fallthru
        _
    $region6: #{tpu_custom_call.1} parent=1 // loop_footer
      %s16 = sadd.s32 1, %s12
    $region7: #{tpu_custom_call.1} parent=1 // loop_footer_branch
      %11 = sbr.rel target = $region3
    $region8: #{tpu_custom_call.1} parent=1 // loop_exit
      _
    %455 = vsyncpa [#allocation3], 1
    %s456 = scalar_lea.sflag [#allocation3], 1
    %457 = vsyncpa %s456, 1

</llo_original>
